<compile_context>
chip_gen: v7x
topology: tpu7x:2x2x1
jax: 0.10.0
libtpu: 0.0.40
codegen_flags: <defaults>
</compile_context>

<pallas_src>
import functools

import jax
import jax.numpy as jnp
from jax.experimental import pallas as pl
from jax.experimental.pallas import tpu as pltpu

KERNEL_SIZE = 25                 # fixed in Model.__init__
PAD = (KERNEL_SIZE - 1) // 2     # replicate pad on each side of the series
SUBLANE = 8


def _round_up(n, m):
    return ((n + m - 1) // m) * m


def _dlinear_kernel(x_ref, w_ref, b_ref, o_ref):
    # Single fused matmul: out = x @ W_total + bias
    o_ref[...] = (
        jnp.dot(x_ref[...], w_ref[...], preferred_element_type=jnp.float32)
        + b_ref[...]
    ).astype(o_ref.dtype)


def prepare_params(Ws, bs, Wt, bt, seq_len):
    """One-time fold of decomposition + two Linear layers into one weight.

    trend = x @ A with A an (L, L) moving-average matrix that absorbs the
    replicate padding, so:
        out = (x - trend) @ Ws.T + trend @ Wt.T + (bs + bt)
            = x @ (Ws.T + A @ (Wt.T - Ws.T)) + (bs + bt)
    Returns (W_total (L, P), bias (1, P)).
    """
    L = seq_len
    P = Ws.shape[0]
    Lp = L + 2 * PAD

    # Banded averaging matrix over the padded series: (Lp, L)
    j = jnp.arange(Lp)[:, None]
    t = jnp.arange(L)[None, :]
    avg_pad = ((j >= t) & (j < t + KERNEL_SIZE)).astype(jnp.float32) / KERNEL_SIZE

    # Expansion matrix E (L, Lp): padded position j reads original index
    # clip(j - PAD, 0, L-1)  (replicate padding).
    src = jnp.clip(jnp.arange(Lp) - PAD, 0, L - 1)                      # (Lp,)
    E = (jnp.arange(L)[:, None] == src[None, :]).astype(jnp.float32)    # (L, Lp)
    A = E @ avg_pad                                                     # (L, L)

    ws_t = Ws.T.astype(jnp.float32)                                     # (L, P)
    wt_t = Wt.T.astype(jnp.float32)                                     # (L, P)
    w_total = ws_t + A @ (wt_t - ws_t)                                  # (L, P)
    bias = (bs + bt).astype(jnp.float32)[None, :]                       # (1, P)
    return w_total, bias


@functools.partial(jax.jit, static_argnames=("row_block",))
def dlinear_forward(x, w, b, row_block=4096):
    """x: (B, seq_len, C) -> (B, pred_len, C)."""
    B, L, C = x.shape
    P = w.shape[1]
    R = B * C

    # Only per-call glue: (B, L, C) -> (B*C, L) so time sits on lanes.
    # TODO(synk): for channel-heavy deployments (C >= 128), grid over B with a
    # (1, L, C) block and contract L directly to avoid both transposes.
    x_flat = jnp.transpose(x, (0, 2, 1)).reshape(R, L)

    # Row tile: multiple of 8 sublanes, >= 2 grid steps when R allows
    # (keeps both v7x TensorCores busy), capped at row_block so per-step
    # overhead amortizes for large R.  No explicit row padding: the ragged
    # last block is handled by Pallas and OOB output rows are masked.
    rb = min(row_block, max(SUBLANE, _round_up(pl.cdiv(R, 2), SUBLANE)))
    grid = (pl.cdiv(R, rb),)

    out_flat = pl.pallas_call(
        _dlinear_kernel,
        out_shape=jax.ShapeDtypeStruct((R, P), x.dtype),
        grid=grid,
        in_specs=[
            pl.BlockSpec((rb, L), lambda i: (i, 0)),      # x rows (tiled)
            pl.BlockSpec((L, P), lambda i: (0, 0)),       # W_total (resident)
            pl.BlockSpec((1, P), lambda i: (0, 0)),       # bias (resident)
        ],
        out_specs=pl.BlockSpec((rb, P), lambda i: (i, 0)),
        compiler_params=pltpu.CompilerParams(
            dimension_semantics=("parallel",)),
    )(x_flat, w, b)

    out = out_flat.reshape(B, C, P)
    return jnp.transpose(out, (0, 2, 1))                  # (B, pred_len, C)


def reference_forward(x, Ws, bs, Wt, bt):
    """Pure-JAX reference mirroring the PyTorch module (individual=False)."""
    B, L, C = x.shape
    front = jnp.repeat(x[:, :1, :], PAD, axis=1)
    end = jnp.repeat(x[:, -1:, :], PAD, axis=1)
    xp = jnp.concatenate([front, x, end], axis=1)
    trend = jnp.stack([xp[:, t:t + KERNEL_SIZE, :].mean(axis=1)
                       for t in range(L)], axis=1)         # (B, L, C)
    seasonal = x - trend
    s = jnp.einsum('blc,pl->bpc', seasonal, Ws) + bs[None, :, None]
    t = jnp.einsum('blc,pl->bpc', trend, Wt) + bt[None, :, None]
    return s + t


if __name__ == "__main__":
    # config: seq_len=48, pred_len=24, enc_in=4, individual=False, batch=2
    SEQ_LEN, PRED_LEN, ENC_IN, BATCH = 48, 24, 4, 2

    key = jax.random.PRNGKey(0)
    kx, kws, kbs, kwt, kbt = jax.random.split(key, 5)

    x = jax.random.normal(kx, (BATCH, SEQ_LEN, ENC_IN), dtype=jnp.float32)

    # nn.Linear default init: U(-1/sqrt(in), 1/sqrt(in))
    bound = 1.0 / (SEQ_LEN ** 0.5)
    Ws = jax.random.uniform(kws, (PRED_LEN, SEQ_LEN), jnp.float32, -bound, bound)
    bs = jax.random.uniform(kbs, (PRED_LEN,), jnp.float32, -bound, bound)
    Wt = jax.random.uniform(kwt, (PRED_LEN, SEQ_LEN), jnp.float32, -bound, bound)
    bt = jax.random.uniform(kbt, (PRED_LEN,), jnp.float32, -bound, bound)

    # One-time parameter preparation (model setup), then the fused forward.
    w_total, bias = prepare_params(Ws, bs, Wt, bt, SEQ_LEN)

    out = dlinear_forward(x, w_total, bias)
    out = jax.block_until_ready(out)

    ref = reference_forward(x, Ws, bs, Wt, bt)
    assert out.shape == (BATCH, PRED_LEN, ENC_IN), out.shape
    assert jnp.allclose(out, ref, rtol=1e-4, atol=1e-4), float(
        jnp.max(jnp.abs(out - ref)))

    print("KERNEL_OK")
</pallas_src>

<mosaic_0001>
module attributes {stable_mosaic.version = 11 : i64} {
  func.func @_dlinear_kernel(%arg0: i32, %arg1: memref<8x48xf32, #tpu.memory_space<vmem>>, %arg2: memref<48x24xf32, #tpu.memory_space<vmem>>, %arg3: memref<1x24xf32, #tpu.memory_space<vmem>>, %arg4: memref<8x24xf32, #tpu.memory_space<vmem>>) attributes {dimension_semantics = [#tpu.dimension_semantics<parallel>], iteration_bounds = array<i64: 1>, scalar_prefetch = 0 : i64, scratch_operands = 0 : i64, tpu.core_type = #tpu.core_type<tc>, window_params = [{transform_indices = @transform_0, window_bounds = array<i64: 8, 48>}, {pipeline_mode = #tpu.pipeline_mode<synchronous>, transform_indices = @transform_1, window_bounds = array<i64: 48, 24>}, {pipeline_mode = #tpu.pipeline_mode<synchronous>, transform_indices = @transform_2, window_bounds = array<i64: 1, 24>}, {transform_indices = @transform_3, window_bounds = array<i64: 8, 24>}]} {
    %c0 = arith.constant 0 : index
    %c0_0 = arith.constant 0 : index
    %0 = vector.load %arg1[%c0, %c0_0] : memref<8x48xf32, #tpu.memory_space<vmem>>, vector<8x48xf32>
    %c0_1 = arith.constant 0 : index
    %c0_2 = arith.constant 0 : index
    %1 = vector.load %arg2[%c0_1, %c0_2] : memref<48x24xf32, #tpu.memory_space<vmem>>, vector<48x24xf32>
    %cst = arith.constant dense<0.000000e+00> : vector<8x24xf32>
    %2 = tpu.matmul %0, %1, %cst {dimension_numbers = #tpu.dot_dimension_numbers<[1], [0], [0], [1], [0, 0, 1, 1], [], []>} : vector<8x48xf32>, vector<48x24xf32>, vector<8x24xf32> -> vector<8x24xf32>
    %c0_3 = arith.constant 0 : index
    %c0_4 = arith.constant 0 : index
    %3 = vector.load %arg3[%c0_3, %c0_4] : memref<1x24xf32, #tpu.memory_space<vmem>>, vector<1x24xf32>
    %4 = vector.broadcast %3 : vector<1x24xf32> to vector<8x24xf32>
    %5 = arith.addf %2, %4 : vector<8x24xf32>
    %c0_5 = arith.constant 0 : index
    %c0_6 = arith.constant 0 : index
    %6 = vector.load %arg4[%c0_5, %c0_6] : memref<8x24xf32, #tpu.memory_space<vmem>>, vector<8x24xf32>
    tpu.vector_store %arg4[%c0_5, %c0_6], %5 {strides = array<i32>} : memref<8x24xf32, #tpu.memory_space<vmem>>, vector<8x24xf32>,
    return
  }
  func.func @transform_0(%arg0: i32) -> (i32, i32) {
    %c0_i32 = arith.constant 0 : i32
    %c0_i32_0 = arith.constant 0 : i32
    return %arg0, %c0_i32 : i32, i32
  }
  func.func @transform_1(%arg0: i32) -> (i32, i32) {
    %c0_i32 = arith.constant 0 : i32
    %c0_i32_0 = arith.constant 0 : i32
    %c0_i32_1 = arith.constant 0 : i32
    return %c0_i32, %c0_i32_0 : i32, i32
  }
  func.func @transform_2(%arg0: i32) -> (i32, i32) {
    %c0_i32 = arith.constant 0 : i32
    %c0_i32_0 = arith.constant 0 : i32
    %c0_i32_1 = arith.constant 0 : i32
    return %c0_i32, %c0_i32_0 : i32, i32
  }
  func.func @transform_3(%arg0: i32) -> (i32, i32) {
    %c0_i32 = arith.constant 0 : i32
    %c0_i32_0 = arith.constant 0 : i32
    return %arg0, %c0_i32 : i32, i32
  }
}

</mosaic_0001>

<llo_original>
// kernel: dlinear_forward.1
$region0: #{dlinear_forward.1}
  #allocation0 [shape = 'u32[]', space=smem, size = 0x4, offset = 0x4, fixed_abs, tag = 'smem constant byte address 0x4 - core index']
  #allocation1 [shape = 'u32[144,128]{1,0:T(1,128)}', space=vmem, size = 0x12000, scoped, tag = 'internal scratch']
  %s0 = inlined_call_operand.vmem [shape: f32[8,48], index: 0, kind: input, shape index: {}]
  %s1 = inlined_call_operand.vmem [shape: f32[48,24], index: 1, kind: input, shape index: {}]
  %s2 = inlined_call_operand.vmem [shape: f32[1,24], index: 2, kind: input, shape index: {}]
  %s3 = inlined_call_operand.hbm [shape: f32[8,24], index: 3, kind: output, shape index: {}]
  %s4 = sld [smem:[#allocation0]]
  $region22: #{dlinear_forward.1} parent=0
    _
  %s6 = ssub.s32 1, %s4
  %s7 = scalar_select 0, %s6, %s4
  $region1: #{dlinear_forward.1} parent=0
    #allocation2 [shape = 'u8[4096]{0}', space=vmem, size = 0x1000, scoped, tag = 'output window, operand 0, single buffered']
    #allocation3 [shape = 's32[1]{0}', space=sflag, size = 0x4, scoped, tag = 'scoped memory for dlinear_forward.1']
    %8 = vsyncpa [#allocation3], 0
    // Predicated region
    $region2: #{dlinear_forward.1} parent=1 // pred_check
      _
    $region3: #{dlinear_forward.1} parent=1 // pred_check_branch
      %10 = sbr.rel (0) target = $region5
    $region4: #{dlinear_forward.1} parent=1 // pred_region
      _
    $region5: #{dlinear_forward.1} parent=1 // pred_fallthru
      _
    // Predicated region
    $region6: #{dlinear_forward.1} parent=1 // pred_check
      _
    $region7: #{dlinear_forward.1} parent=1 // pred_check_branch
      %12 = sbr.rel (0) target = $region9
    $region8: #{dlinear_forward.1} parent=1 // pred_region
      _
    $region9: #{dlinear_forward.1} parent=1 // pred_fallthru
      _
    // Predicated region
    $region10: #{dlinear_forward.1} parent=1 // pred_check
      _
    $region11: #{dlinear_forward.1} parent=1 // pred_check_branch
      %14 = sbr.rel (0) target = $region13
    $region12: #{dlinear_forward.1} parent=1 // pred_region
      _
    $region13: #{dlinear_forward.1} parent=1 // pred_fallthru
      _
    %v15 = vld [vmem:[%s0] sm:$0xff]
    %v16 = vld [vmem:[%s1] sm:$0xff]
    %v17 = vld [vmem:[%s1 + $0x8] sm:$0xff]
    %v18 = vld [vmem:[%s1 + $0x10] sm:$0xff]
    %v19 = vld [vmem:[%s1 + $0x18] sm:$0xff]
    %v20 = vld [vmem:[%s1 + $0x20] sm:$0xff]
    %v21 = vld [vmem:[%s1 + $0x28] sm:$0xff]
    %v22 = vld [vmem:[%s2] sm:$0x1]
    %v24 = vlaneseq
    %v25 = vshrl.u32 %v24, 7
    %v26 = vsub.s32 0, %v25
    %v27 = vrot.slane %v22, %v26
    %vm29 = vcmask 392192
    %v31 = vsel %vm29, %v15, 0
    %33 = vmatprep.subr.mxu0 0.0
    %34 = vmatpush1.msra.mxu0 %v16
    %35 = vmatprep.subr.mxu0 0.0
    %36 = vmatpush1.msra.mxu0 %v17
    %37 = vmatprep.subr.mxu0 0.0
    %38 = vmatpush1.msra.mxu0 %v18
    %39 = vmatprep.subr.mxu0 0.0
    %40 = vmatpush1.msra.mxu0 %v19
    %41 = vmatprep.subr.mxu0 0.0
    %42 = vmatpush1.msra.mxu0 %v20
    %43 = vmatprep.subr.mxu0 0.0
    %44 = vmatpush1.msra.mxu0 %v21
    %45 = vmatprep.subr.mxu0 0.0
    %46 = vmatpush1.msra.mxu0 0.0
    %47 = vmatprep.subr.mxu0 0.0
    %48 = vmatpush1.msra.mxu0 0.0
    %49 = vmatprep.subr.mxu0 0.0
    %50 = vmatpush1.msra.mxu0 0.0
    %51 = vmatprep.subr.mxu0 0.0
    %52 = vmatpush1.msra.mxu0 0.0
    %53 = vmatprep.subr.mxu0 0.0
    %54 = vmatpush1.msra.mxu0 0.0
    %55 = vmatprep.subr.mxu0 0.0
    %56 = vmatpush1.msra.mxu0 0.0
    %57 = vmatprep.subr.mxu0 0.0
    %58 = vmatpush1.msra.mxu0 0.0
    %59 = vmatprep.subr.mxu0 0.0
    %60 = vmatpush1.msra.mxu0 0.0
    %61 = vmatprep.subr.mxu0 0.0
    %62 = vmatpush1.msra.mxu0 0.0
    %63 = vmatprep.subr.mxu0 0.0
    %64 = vmatpush1.msra.mxu0 0.0
    %65 = vmatprep.subr.mxu0 0.0
    %66 = vmatpush1.msra.mxu0 0.0
    %67 = vmatprep.subr.mxu0 0.0
    %68 = vmatpush1.msra.mxu0 0.0
    %69 = vmatprep.subr.mxu0 0.0
    %70 = vmatpush1.msra.mxu0 0.0
    %71 = vmatprep.subr.mxu0 0.0
    %72 = vmatpush1.msra.mxu0 0.0
    %73 = vmatprep.subr.mxu0 0.0
    %74 = vmatpush1.msra.mxu0 0.0
    %75 = vmatprep.subr.mxu0 0.0
    %76 = vmatpush1.msra.mxu0 0.0
    %77 = vmatprep.subr.mxu0 0.0
    %78 = vmatpush1.msra.mxu0 0.0
    %79 = vmatprep.subr.mxu0 0.0
    %80 = vmatpush1.msra.mxu0 0.0
    %81 = vmatprep.subr.mxu0 0.0
    %82 = vmatpush1.msra.mxu0 0.0
    %83 = vmatprep.subr.mxu0 0.0
    %84 = vmatpush1.msra.mxu0 0.0
    %85 = vmatprep.subr.mxu0 0.0
    %86 = vmatpush1.msra.mxu0 0.0
    %87 = vmatprep.subr.mxu0 0.0
    %88 = vmatpush1.msra.mxu0 0.0
    %89 = vmatprep.subr.mxu0 0.0
    %90 = vmatpush1.msra.mxu0 0.0
    %91 = vmatprep.subr.mxu0 0.0
    %92 = vmatpush1.msra.mxu0 0.0
    %93 = vmatprep.subr.mxu0 0.0
    %94 = vmatpush1.msra.mxu0 0.0
    %95 = vmatprep.subr.mxu0 0.0
    %96 = vmatpush1.msra.mxu0 0.0
    %97 = vmatprep.mubr.f32.mxu0 0.0
    %98 = vmatmul.mubr.f32.gmra.mrb[0].mxu0 %v31
    %v99 = vpop.f32.mrb[0].mxu0
    %v100 = vadd.f32 %v27, %v99
    %v101 = vpop.f32.mrb[0].mxu0
    %102 = vdwg.mxu0
    %vm103 = vcmask 195584
    %104 = vst.msk [vmem:[#allocation2] sm:$0xff] %vm103, %v100
    // Predicated region
    $region14: #{dlinear_forward.1} parent=1 // pred_check
      _
    $region15: #{dlinear_forward.1} parent=1 // pred_check_branch
      %106 = sbr.rel (0) target = $region17
    $region16: #{dlinear_forward.1} parent=1 // pred_region
      %s108 = ssub.s32 128, 128
      %109 = vsyncadd [#allocation3], %s108
      %s111 = sshll.u32 [#allocation2], 4
      %s112 = int_to_ptr.vmem [resolvable:$true] %s111
      %114 = dma.vmem_to_hbm [thread:$0]  %s112, 128, %s3, [#allocation3]
    $region17: #{dlinear_forward.1} parent=1 // pred_fallthru
      _
    // Predicated region
    $region18: #{dlinear_forward.1} parent=1 // pred_check
      _
    $region19: #{dlinear_forward.1} parent=1 // pred_check_branch
      %116 = sbr.rel (0) target = $region21
    $region20: #{dlinear_forward.1} parent=1 // pred_region
      %117 = dma.done [#allocation3], 128
    $region21: #{dlinear_forward.1} parent=1 // pred_fallthru
      _
    %118 = vsyncpa [#allocation3], 1

</llo_original>
